<compile_context>
chip_gen: v6e
topology: v6e:2x2x1
jax: 0.10.0
libtpu: 0.0.40
codegen_flags: <defaults>
</compile_context>

<pallas_src>
import jax
import jax.numpy as jnp
from jax.experimental import pallas as pl
from jax.experimental.pallas import tpu as pltpu


_LANE_WIDTH = 2048                     # last dim: big multiple of 128 (lane-dense stores)
_BLOCK_ROWS = 512                      # (512, 2048) f32 = 4 MiB block
_VMEM_LIMIT_BYTES = 48 * 1024 * 1024   # < 64 MiB/TC on v7x; < physical on v5e/v6e


def _rezero_kernel(alpha_ref, x_ref, o_ref):
    # alpha lives in SMEM as a (1,)-shaped f32 scalar; pure VPU broadcast-multiply.
    a = alpha_ref[0]
    o_ref[...] = (a * x_ref[...].astype(jnp.float32)).astype(o_ref.dtype)


def rezero(x, alpha, *, lane_width=_LANE_WIDTH, block_rows=_BLOCK_ROWS):
    """alpha * x computed in a Pallas TPU kernel (Rezero forward).

    x:     any-shape float array (e.g. an NCHW feature map)
    alpha: scalar parameter (shape () or (1,))
    """
    orig_shape = x.shape
    orig_dtype = x.dtype
    total = int(x.size)

    # ---- lane-dense 2-D slab: (rows, cols), cols a large multiple of 128 ----
    cols = max(128, (int(lane_width) // 128) * 128)
    flat = x.reshape(-1)
    padded_total = pl.cdiv(total, cols) * cols
    if padded_total != total:
        flat = jnp.pad(flat, (0, padded_total - total))
    rows = padded_total // cols
    x2d = flat.reshape(rows, cols)

    # ---- block rows: large tile, sublane-aligned unless it's the full extent ----
    br = min(int(block_rows), rows)
    if br < rows:
        br = max(8, (br // 8) * 8)   # keep (8, 128) tiling rule when not full-extent
    grid = (pl.cdiv(rows, br),)      # partial last block handled by Pallas

    alpha_arr = jnp.asarray(alpha, dtype=jnp.float32).reshape(1)

    out2d = pl.pallas_call(
        _rezero_kernel,
        out_shape=jax.ShapeDtypeStruct((rows, cols), orig_dtype),
        grid_spec=pltpu.PrefetchScalarGridSpec(
            num_scalar_prefetch=0,
            grid=grid,
            in_specs=[
                pl.BlockSpec(memory_space=pltpu.SMEM),          # alpha scalar
                pl.BlockSpec((br, cols), lambda i: (i, 0)),     # x tile
            ],
            out_specs=pl.BlockSpec((br, cols), lambda i: (i, 0)),
        ),
        compiler_params=pltpu.CompilerParams(
            dimension_semantics=("parallel",),
            vmem_limit_bytes=_VMEM_LIMIT_BYTES,
        ),
    )(alpha_arr, x2d)

    out_flat = out2d.reshape(-1)
    if padded_total != total:
        out_flat = out_flat[:total]
    return out_flat.reshape(orig_shape)


if __name__ == "__main__":
    key = jax.random.PRNGKey(0)
    # Small NCHW input consistent with a conv-style feature map.
    x = jax.random.normal(key, (2, 4, 16, 16), dtype=jnp.float32)

    # Deterministic parameter init: nn.Parameter(torch.zeros(1)) -> alpha = 0.
    alpha = jnp.zeros((1,), dtype=jnp.float32)

    out = jax.block_until_ready(rezero(x, alpha))
    ref = alpha[0] * x
    assert out.shape == x.shape and out.dtype == x.dtype
    assert jnp.allclose(out, ref, atol=1e-6)

    # Non-trivial alpha.
    alpha2 = jnp.asarray([0.37], dtype=jnp.float32)
    out2 = jax.block_until_ready(rezero(x, alpha2))
    assert jnp.allclose(out2, alpha2[0] * x, atol=1e-5)

    # Padded path: total elements not a multiple of the lane width.
    x3 = jax.random.normal(jax.random.PRNGKey(0), (3, 5, 7, 11), dtype=jnp.float32)
    out3 = jax.block_until_ready(rezero(x3, alpha2))
    assert jnp.allclose(out3, alpha2[0] * x3, atol=1e-5)

    # Partial-last-block path: rows=24, block_rows=16 -> grid=cdiv(24,16)=2.
    x4 = jax.random.normal(jax.random.PRNGKey(0), (2, 4, 48, 128), dtype=jnp.float32)
    out4 = jax.block_until_ready(rezero(x4, alpha2, block_rows=16))
    assert jnp.allclose(out4, alpha2[0] * x4, atol=1e-5)

    print("KERNEL_OK")
</pallas_src>

<mosaic_0001>
module attributes {stable_mosaic.version = 11 : i64} {
  func.func @_rezero_kernel(%arg0: i32, %arg1: memref<1xf32, #tpu.memory_space<smem>>, %arg2: memref<1x2048xf32, #tpu.memory_space<vmem>>, %arg3: memref<1x2048xf32, #tpu.memory_space<vmem>>) attributes {dimension_semantics = [#tpu.dimension_semantics<parallel>], iteration_bounds = array<i64: 1>, scalar_prefetch = 0 : i64, scratch_operands = 0 : i64, tpu.core_type = #tpu.core_type<tc>, window_params = [{transform_indices = @transform_0, window_bounds = array<i64: 1>}, {transform_indices = @transform_1, window_bounds = array<i64: 1, 2048>}, {transform_indices = @transform_2, window_bounds = array<i64: 1, 2048>}]} {
    %c0 = arith.constant 0 : index
    %0 = memref.load %arg1[%c0] : memref<1xf32, #tpu.memory_space<smem>>
    %c0_0 = arith.constant 0 : index
    %c0_1 = arith.constant 0 : index
    %1 = vector.load %arg2[%c0_0, %c0_1] : memref<1x2048xf32, #tpu.memory_space<vmem>>, vector<1x2048xf32>
    %2 = vector.broadcast %0 : f32 to vector<1x2048xf32>
    %3 = arith.mulf %2, %1 : vector<1x2048xf32>
    %c0_2 = arith.constant 0 : index
    %c0_3 = arith.constant 0 : index
    %4 = vector.load %arg3[%c0_2, %c0_3] : memref<1x2048xf32, #tpu.memory_space<vmem>>, vector<1x2048xf32>
    tpu.vector_store %arg3[%c0_2, %c0_3], %3 {strides = array<i32>} : memref<1x2048xf32, #tpu.memory_space<vmem>>, vector<1x2048xf32>,
    return
  }
  func.func @transform_0(%arg0: i32) -> i32 {
    %c0_i32 = arith.constant 0 : i32
    %c0_i32_0 = arith.constant 0 : i32
    return %c0_i32 : i32
  }
  func.func @transform_1(%arg0: i32) -> (i32, i32) {
    %c0_i32 = arith.constant 0 : i32
    %c0_i32_0 = arith.constant 0 : i32
    return %arg0, %c0_i32 : i32, i32
  }
  func.func @transform_2(%arg0: i32) -> (i32, i32) {
    %c0_i32 = arith.constant 0 : i32
    %c0_i32_0 = arith.constant 0 : i32
    return %arg0, %c0_i32 : i32, i32
  }
}

</mosaic_0001>

<llo_original>
// kernel: tpu_custom_call.1
$region0: #{tpu_custom_call.1}
  #allocation0 [shape = 'u32[]', space=smem, size = 0x4, offset = 0x4, fixed_abs, tag = 'smem constant byte address 0x4 - core index']
  #allocation1 [shape = 'u32[144,128]{1,0:T(1,128)}', space=vmem, size = 0x12000, scoped, tag = 'internal scratch']
  #allocation2 [shape = 'f32[1]{0:T(128)S(6)}', space=smem, size = 0x200, scoped, tag = 'scoped memory for tpu_custom_call.1']
  %s0 = inlined_call_operand.<no memory space> [shape: f32[1], index: 0, kind: input, shape index: {}]
  %s1 = inlined_call_operand.hbm [shape: f32[1,2048], index: 1, kind: input, shape index: {}]
  %s2 = inlined_call_operand.hbm [shape: f32[1,2048], index: 2, kind: output, shape index: {}]
  %s3 = sld [smem:[#allocation0]]
  $region22: #{tpu_custom_call.1} parent=0
    _
  %s5 = ssub.s32 1, %s3
  %s6 = scalar_select 0, %s5, %s3
  %7 = sst [smem:[#allocation2]] %s0
  $region1: #{tpu_custom_call.1} parent=0
    #allocation3 [shape = 'u8[8192]{0}', space=vmem, size = 0x2000, scoped, tag = 'input window, operand 1, single buffered']
    #allocation4 [shape = 's32[1]{0}', space=sflag, size = 0x4, scoped, tag = 'scoped memory for tpu_custom_call.1']
    #allocation5 [shape = 's32[1]{0}', space=sflag, size = 0x4, scoped, tag = 'scoped memory for tpu_custom_call.1']
    #allocation6 [shape = 'u8[8192]{0}', space=vmem, size = 0x2000, scoped, tag = 'output window, operand 0, single buffered']
    %8 = vsyncpa [#allocation4], 0
    %9 = vsyncpa [#allocation5], 0
    // Predicated region
    $region2: #{tpu_custom_call.1} parent=1 // pred_check
      _
    $region3: #{tpu_custom_call.1} parent=1 // pred_check_branch
      %11 = sbr.rel (0) target = $region5
    $region4: #{tpu_custom_call.1} parent=1 // pred_region
      _
    $region5: #{tpu_custom_call.1} parent=1 // pred_fallthru
      _
    // Predicated region
    $region6: #{tpu_custom_call.1} parent=1 // pred_check
      _
    $region7: #{tpu_custom_call.1} parent=1 // pred_check_branch
      %13 = sbr.rel (0) target = $region9
    $region8: #{tpu_custom_call.1} parent=1 // pred_region
      %s15 = ssub.s32 256, 256
      %16 = vsyncadd [#allocation4], %s15
      %s18 = sshll.u32 [#allocation3], 4
      %s19 = int_to_ptr.vmem [resolvable:$true] %s18
      %21 = dma.hbm_to_vmem [thread:$0]  %s1, 256, %s19, [#allocation4]
    $region9: #{tpu_custom_call.1} parent=1 // pred_fallthru
      _
    // Predicated region
    $region10: #{tpu_custom_call.1} parent=1 // pred_check
      _
    $region11: #{tpu_custom_call.1} parent=1 // pred_check_branch
      %23 = sbr.rel (0) target = $region13
    $region12: #{tpu_custom_call.1} parent=1 // pred_region
      %24 = dma.done [#allocation4], 256
    $region13: #{tpu_custom_call.1} parent=1 // pred_fallthru
      _
    %s25 = sld [smem:[#allocation2]]
    %v26 = vld [vmem:[#allocation3] sm:$0xff]
    %v27 = vld [vmem:[#allocation3 + $0x8] sm:$0xff]
    %v28 = vstv %s25
    %v29 = vmul.f32 %v28, %v26
    %v30 = vmul.f32 %v28, %v27
    %31 = vst [vmem:[#allocation6] sm:$0xff] %v29
    %32 = vst [vmem:[#allocation6 + $0x8] sm:$0xff] %v30
    // Predicated region
    $region14: #{tpu_custom_call.1} parent=1 // pred_check
      _
    $region15: #{tpu_custom_call.1} parent=1 // pred_check_branch
      %34 = sbr.rel (0) target = $region17
    $region16: #{tpu_custom_call.1} parent=1 // pred_region
      %s36 = ssub.s32 256, 256
      %37 = vsyncadd [#allocation5], %s36
      %s39 = sshll.u32 [#allocation6], 4
      %s40 = int_to_ptr.vmem [resolvable:$true] %s39
      %42 = dma.vmem_to_hbm [thread:$0]  %s40, 256, %s2, [#allocation5]
    $region17: #{tpu_custom_call.1} parent=1 // pred_fallthru
      _
    // Predicated region
    $region18: #{tpu_custom_call.1} parent=1 // pred_check
      _
    $region19: #{tpu_custom_call.1} parent=1 // pred_check_branch
      %44 = sbr.rel (0) target = $region21
    $region20: #{tpu_custom_call.1} parent=1 // pred_region
      %45 = dma.done [#allocation5], 256
    $region21: #{tpu_custom_call.1} parent=1 // pred_fallthru
      _
    %46 = vsyncpa [#allocation4], 1
    %47 = vsyncpa [#allocation5], 1

</llo_original>
